<compile_context>
chip_gen: v7x
topology: tpu7x:2x2x1
jax: 0.10.0
libtpu: 0.0.40
codegen_flags: <defaults>
</compile_context>

<pallas_src>
import jax
import jax.numpy as jnp
from jax.experimental import pallas as pl
from jax.experimental.pallas import tpu as pltpu


def _scale_kernel(x_ref, e_ref, o_ref):
    # Pure VPU elementwise scale; e_ref is (1, tf) and broadcasts over rows.
    o_ref[...] = x_ref[...] * e_ref[...]


def _round_up(x, m):
    return ((x + m - 1) // m) * m


def _round_down(x, m):
    return (x // m) * m


def relu_scaler_forward(x, energy, *, target_tile_bytes=4 * 1024 * 1024):
    """Apply y = x * energy (energy broadcast over trailing dim).

    x: (..., F) array; energy: (F,) array (any float dtype, cast to x.dtype).
    """
    F = energy.shape[-1]
    assert x.shape[-1] == F, "last dim of x must equal input_size"

    orig_shape = x.shape
    dtype = x.dtype
    dtype_bytes = jnp.dtype(dtype).itemsize

    x2d = x.reshape(-1, F)
    B = x2d.shape[0]

    # Cast the (small) energy vector once, outside the kernel.
    e2d = energy.astype(dtype).reshape(1, F)

    # Dtype-aware sublane granule (packing: 8 for 4B, 16 for 2B, 32 for 1B).
    sub = {4: 8, 2: 16, 1: 32}.get(dtype_bytes, 8)

    # ---- Feature (lane) axis tile ----------------------------------------
    # Prefer one full-width tile (contiguous DMAs); only split for huge F.
    max_tf = max(128, _round_down(target_tile_bytes // (sub * dtype_bytes), 128))
    if F <= max_tf:
        tf = F                       # full array dim -> always a legal block
    else:
        tf = max_tf                  # multiple of 128; edge block is masked

    # ---- Row (sublane) axis tile: aim for ~target_tile_bytes per x tile ---
    rows_for_target = max(sub, _round_down(target_tile_bytes // (tf * dtype_bytes), sub))
    if B <= rows_for_target:
        tb = B                       # full array dim -> always a legal block
    else:
        tb = rows_for_target         # multiple of sub; edge block is masked

    grid = (pl.cdiv(B, tb), pl.cdiv(F, tf))

    cost = pl.CostEstimate(
        flops=int(B) * int(F),
        transcendentals=0,
        bytes_accessed=2 * int(B) * int(F) * dtype_bytes + int(F) * dtype_bytes,
    )

    out = pl.pallas_call(
        _scale_kernel,
        out_shape=jax.ShapeDtypeStruct((B, F), dtype),
        grid_spec=pltpu.PrefetchScalarGridSpec(
            num_scalar_prefetch=0,
            grid=grid,
            in_specs=[
                pl.BlockSpec((tb, tf), lambda i, j: (i, j)),   # x tile
                pl.BlockSpec((1, tf), lambda i, j: (0, j)),    # energy slice
            ],
            out_specs=pl.BlockSpec((tb, tf), lambda i, j: (i, j)),
        ),
        compiler_params=pltpu.CompilerParams(
            # Both axes fully independent -> parallel (multi-TC sharding).
            dimension_semantics=("parallel", "parallel"),
            # ~16 MiB live (double-buffered in + out 4 MiB tiles); stay well
            # under v7x's 64 MiB physical VMEM while raising the default cap.
            vmem_limit_bytes=48 * 1024 * 1024,
        ),
        cost_estimate=cost,
    )(x2d, e2d)

    return out.reshape(orig_shape)


def init_relu_scaler_params(input_size, energy_init=1.0, dtype=jnp.float32):
    # Matches nn.Parameter(torch.full((input_size,), energy_init))
    return jnp.full((input_size,), energy_init, dtype=dtype)


def update_energy(new_energy):
    # Mirrors ReLU_Scaler.update_energy (clamp to [0.7, 1.5]); pure JAX.
    return jnp.clip(new_energy, 0.7, 1.5)


if __name__ == "__main__":
    key = jax.random.PRNGKey(0)

    # Primary test: shapes consistent with the module (batch, input_size).
    batch, input_size = 16, 128
    x = jax.random.normal(key, (batch, input_size), dtype=jnp.float32)
    energy = init_relu_scaler_params(input_size, energy_init=1.0)
    # Make the scale non-trivial so the test is meaningful.
    energy = energy * (1.0 + 0.01 * jnp.arange(input_size, dtype=jnp.float32))

    y = jax.block_until_ready(relu_scaler_forward(x, energy))
    ref = x * energy[None, :]
    assert y.shape == x.shape and y.dtype == x.dtype
    assert jnp.allclose(y, ref, atol=1e-6), "mismatch vs reference (f32)"

    # Secondary test: ragged shapes (F not multiple of 128, B not multiple of
    # 8) with a 3-D input — exercises the full-dim / masked-edge block path.
    k2 = jax.random.PRNGKey(0)
    x3 = jax.random.normal(k2, (2, 5, 96), dtype=jnp.float32)
    e3 = jnp.linspace(0.7, 1.5, 96, dtype=jnp.float32)
    y3 = jax.block_until_ready(relu_scaler_forward(x3, e3))
    ref3 = x3 * e3[None, None, :]
    assert y3.shape == x3.shape and y3.dtype == x3.dtype
    assert jnp.allclose(y3, ref3, atol=1e-6), "mismatch vs reference (ragged f32)"

    # Tertiary test: bf16 path (dtype-aware tiling, energy cast in wrapper).
    k3 = jax.random.PRNGKey(0)
    xb = jax.random.normal(k3, (4, 8, 160), dtype=jnp.bfloat16)
    eb = jnp.linspace(0.7, 1.5, 160, dtype=jnp.float32)
    yb = jax.block_until_ready(relu_scaler_forward(xb, eb))
    refb = xb * eb.astype(jnp.bfloat16)[None, None, :]
    assert yb.shape == xb.shape and yb.dtype == xb.dtype
    assert jnp.allclose(yb.astype(jnp.float32), refb.astype(jnp.float32),
                        rtol=1e-2, atol=1e-2), "mismatch vs reference (bf16)"

    print("KERNEL_OK")
</pallas_src>

<mosaic_0001>
module attributes {stable_mosaic.version = 11 : i64} {
  func.func @_scale_kernel(%arg0: i32, %arg1: i32, %arg2: memref<16x128xf32, #tpu.memory_space<vmem>>, %arg3: memref<1x128xf32, #tpu.memory_space<vmem>>, %arg4: memref<16x128xf32, #tpu.memory_space<vmem>>) attributes {dimension_semantics = [#tpu.dimension_semantics<parallel>, #tpu.dimension_semantics<parallel>], iteration_bounds = array<i64: 1, 1>, scalar_prefetch = 0 : i64, scratch_operands = 0 : i64, tpu.core_type = #tpu.core_type<tc>, window_params = [{transform_indices = @transform_0, window_bounds = array<i64: 16, 128>}, {transform_indices = @transform_1, window_bounds = array<i64: 1, 128>}, {transform_indices = @transform_2, window_bounds = array<i64: 16, 128>}]} {
    %c0 = arith.constant 0 : index
    %c0_0 = arith.constant 0 : index
    %0 = vector.load %arg2[%c0, %c0_0] : memref<16x128xf32, #tpu.memory_space<vmem>>, vector<16x128xf32>
    %c0_1 = arith.constant 0 : index
    %c0_2 = arith.constant 0 : index
    %1 = vector.load %arg3[%c0_1, %c0_2] : memref<1x128xf32, #tpu.memory_space<vmem>>, vector<1x128xf32>
    %2 = vector.broadcast %1 : vector<1x128xf32> to vector<16x128xf32>
    %3 = arith.mulf %0, %2 : vector<16x128xf32>
    %c0_3 = arith.constant 0 : index
    %c0_4 = arith.constant 0 : index
    %4 = vector.load %arg4[%c0_3, %c0_4] : memref<16x128xf32, #tpu.memory_space<vmem>>, vector<16x128xf32>
    tpu.vector_store %arg4[%c0_3, %c0_4], %3 {strides = array<i32>} : memref<16x128xf32, #tpu.memory_space<vmem>>, vector<16x128xf32>,
    return
  }
  func.func @transform_0(%arg0: i32, %arg1: i32) -> (i32, i32) {
    %c0_i32 = arith.constant 0 : i32
    return %arg0, %arg1 : i32, i32
  }
  func.func @transform_1(%arg0: i32, %arg1: i32) -> (i32, i32) {
    %c0_i32 = arith.constant 0 : i32
    %c0_i32_0 = arith.constant 0 : i32
    return %c0_i32, %arg1 : i32, i32
  }
  func.func @transform_2(%arg0: i32, %arg1: i32) -> (i32, i32) {
    %c0_i32 = arith.constant 0 : i32
    return %arg0, %arg1 : i32, i32
  }
}

</mosaic_0001>

<llo_original>
// kernel: tpu_custom_call.1
$region0: #{tpu_custom_call.1}
  #allocation0 [shape = 'u32[]', space=smem, size = 0x4, offset = 0x4, fixed_abs, tag = 'smem constant byte address 0x4 - core index']
  #allocation1 [shape = 'u32[144,128]{1,0:T(1,128)}', space=vmem, size = 0x12000, scoped, tag = 'internal scratch']
  %s0 = inlined_call_operand.hbm [shape: f32[16,128], index: 0, kind: input, shape index: {}]
  %s1 = inlined_call_operand.vmem [shape: f32[1,128], index: 1, kind: input, shape index: {}]
  %s2 = inlined_call_operand.hbm [shape: f32[16,128], index: 2, kind: output, shape index: {}]
  %s3 = sld [smem:[#allocation0]]
  $region22: #{tpu_custom_call.1} parent=0
    _
  %s5 = ssub.s32 1, %s3
  %s6 = scalar_select 0, %s5, %s3
  $region1: #{tpu_custom_call.1} parent=0
    #allocation2 [shape = 'u8[8192]{0}', space=vmem, size = 0x2000, scoped, tag = 'input window, operand 0, single buffered']
    #allocation3 [shape = 's32[1]{0}', space=sflag, size = 0x4, scoped, tag = 'scoped memory for tpu_custom_call.1']
    #allocation4 [shape = 's32[1]{0}', space=sflag, size = 0x4, scoped, tag = 'scoped memory for tpu_custom_call.1']
    #allocation5 [shape = 'u8[8192]{0}', space=vmem, size = 0x2000, scoped, tag = 'output window, operand 0, single buffered']
    %7 = vsyncpa [#allocation3], 0
    %8 = vsyncpa [#allocation4], 0
    // Predicated region
    $region2: #{tpu_custom_call.1} parent=1 // pred_check
      _
    $region3: #{tpu_custom_call.1} parent=1 // pred_check_branch
      %10 = sbr.rel (0) target = $region5
    $region4: #{tpu_custom_call.1} parent=1 // pred_region
      %s12 = ssub.s32 256, 256
      %13 = vsyncadd [#allocation3], %s12
      %s14 = sshll.u32 [#allocation2], 4
      %s15 = int_to_ptr.vmem [resolvable:$true] %s14
      %20 = dma.hbm_to_vmem [thread:$0]  %s0, 256, %s15, [#allocation3], 128, 128, 8
    $region5: #{tpu_custom_call.1} parent=1 // pred_fallthru
      _
    // Predicated region
    $region6: #{tpu_custom_call.1} parent=1 // pred_check
      _
    $region7: #{tpu_custom_call.1} parent=1 // pred_check_branch
      %22 = sbr.rel (0) target = $region9
    $region8: #{tpu_custom_call.1} parent=1 // pred_region
      _
    $region9: #{tpu_custom_call.1} parent=1 // pred_fallthru
      _
    // Predicated region
    $region10: #{tpu_custom_call.1} parent=1 // pred_check
      _
    $region11: #{tpu_custom_call.1} parent=1 // pred_check_branch
      %24 = sbr.rel (0) target = $region13
    $region12: #{tpu_custom_call.1} parent=1 // pred_region
      %25 = dma.done [#allocation3], 256
    $region13: #{tpu_custom_call.1} parent=1 // pred_fallthru
      _
    %v26 = vld [vmem:[#allocation2] sm:$0xff]
    %v27 = vld [vmem:[#allocation2 + $0x8] sm:$0xff]
    %v28 = vld [vmem:[%s1] sm:$0x1]
    %v30 = vlaneseq
    %v31 = vshrl.u32 %v30, 7
    %v32 = vsub.s32 0, %v31
    %v33 = vrot.slane %v28, %v32
    %v35 = vmul.f32 %v26, %v33
    %v36 = vmul.f32 %v27, %v33
    %37 = vst [vmem:[#allocation5] sm:$0xff] %v35
    %38 = vst [vmem:[#allocation5 + $0x8] sm:$0xff] %v36
    // Predicated region
    $region14: #{tpu_custom_call.1} parent=1 // pred_check
      _
    $region15: #{tpu_custom_call.1} parent=1 // pred_check_branch
      %40 = sbr.rel (0) target = $region17
    $region16: #{tpu_custom_call.1} parent=1 // pred_region
      %s42 = ssub.s32 256, 256
      %43 = vsyncadd [#allocation4], %s42
      %s44 = sshll.u32 [#allocation5], 4
      %s45 = int_to_ptr.vmem [resolvable:$true] %s44
      %50 = dma.vmem_to_hbm [thread:$0]  %s45, 256, %s2, [#allocation4], 128, 128, 8
    $region17: #{tpu_custom_call.1} parent=1 // pred_fallthru
      _
    // Predicated region
    $region18: #{tpu_custom_call.1} parent=1 // pred_check
      _
    $region19: #{tpu_custom_call.1} parent=1 // pred_check_branch
      %52 = sbr.rel (0) target = $region21
    $region20: #{tpu_custom_call.1} parent=1 // pred_region
      %53 = dma.done [#allocation4], 256
    $region21: #{tpu_custom_call.1} parent=1 // pred_fallthru
      _
    %54 = vsyncpa [#allocation3], 1
    %55 = vsyncpa [#allocation4], 1

</llo_original>
